<compile_context>
chip_gen: v7x
topology: tpu7x:2x2x1
jax: 0.10.0
libtpu: 0.0.40
codegen_flags: <defaults>
</compile_context>

<pallas_src>
import jax
import jax.numpy as jnp
from jax import lax
from jax.experimental import pallas as pl
from jax.experimental.pallas import tpu as pltpu

_NEG_BIG = -1e30  # finite "minus infinity" additive mask bias


# --------------------------------------------------------------------------
# helpers
# --------------------------------------------------------------------------
def _default_vmem_limit():
    # ~3/4 of physical VMEM, capped: v5e/v6e (128 MiB) -> 96 MiB, v7x (64 MiB) -> 48 MiB.
    try:
        cap = pltpu.get_tpu_info().vmem_capacity_bytes
    except Exception:
        cap = 128 * 1024 * 1024
    return min(3 * cap // 4, 96 * 1024 * 1024)


def _pick_b_block(B):
    # Prefer >=4 grid steps with Bb a multiple of 8 (sublane-aligned blocks,
    # pipelining + v7x dual-TC sharding); fall back to the whole batch when tiny.
    for bb in (32, 16, 8):
        if B % bb == 0 and B // bb >= 4:
            return bb
    return B


def _interleave_gate_cols(w_f, w_b, H):
    # columns [i f g o] per direction -> [i_f i_b | f_f f_b | g_f g_b | o_f o_b]
    cols = []
    for k in range(4):
        cols.append(w_f[..., k * H:(k + 1) * H])
        cols.append(w_b[..., k * H:(k + 1) * H])
    return jnp.concatenate(cols, axis=-1)


def _block_diag_whh(whh_f_t, whh_b_t, H):
    # (2H, 8H): rows [h_f; h_b], columns gate-interleaved as above.
    zeros = jnp.zeros((H, H), whh_f_t.dtype)
    groups = []
    for k in range(4):
        f_k = whh_f_t[:, k * H:(k + 1) * H]
        b_k = whh_b_t[:, k * H:(k + 1) * H]
        groups.append(jnp.concatenate(
            [jnp.concatenate([f_k, zeros], axis=0),
             jnp.concatenate([zeros, b_k], axis=0)], axis=1))
    return jnp.concatenate(groups, axis=1)


# --------------------------------------------------------------------------
# Kernel 1: attention scores + BiDAF fusion + merge linear + hoisted BiLSTM
#           input projection (grid over batch blocks); bf16 gate output.
# --------------------------------------------------------------------------
def bidaf_attn_gates_kernel(p_ref, q_ref, pbias_ref, qbias_ref,
                            watt_ref, diag_ref, wlin_ref, blin_ref,
                            wih_ref, bih_ref, out_ref):
    Bb, Tp, D = p_ref.shape
    Tq = q_ref.shape[1]
    Ha = watt_ref.shape[1]
    bf16 = jnp.bfloat16

    p = p_ref[...]                                   # (Bb, Tp, D) f32
    q = q_ref[...]                                   # (Bb, Tq, D) f32
    p2d = p.reshape(Bb * Tp, D)
    q2d = q.reshape(Bb * Tq, D)
    w_att = watt_ref[...]                            # (D, Ha) bf16

    # AttentionScore: relu projections; MXU operands bf16, f32 accumulate.
    p_rep = jnp.maximum(jnp.dot(p2d.astype(bf16), w_att,
                                preferred_element_type=jnp.float32), 0.0)
    q_rep = jnp.maximum(jnp.dot(q2d.astype(bf16), w_att,
                                preferred_element_type=jnp.float32), 0.0)
    # diag applied to q_rep (matches reference; same diagonal bilinear score).
    q_rep = q_rep * diag_ref[...]
    scores = jnp.einsum("bph,bqh->bpq",
                        p_rep.reshape(Bb, Tp, Ha).astype(bf16),
                        q_rep.reshape(Bb, Tq, Ha).astype(bf16),
                        preferred_element_type=jnp.float32)     # (Bb, Tp, Tq)

    # alpha = softmax over question positions (additive -1e30 padding bias).
    alpha_scores = scores + qbias_ref[...][:, None, :]
    row_max = jnp.max(alpha_scores, axis=-1)                    # (Bb, Tp) lane-dense
    e = jnp.exp(alpha_scores - row_max[..., None])
    alpha = e * pl.reciprocal(jnp.sum(e, axis=-1, keepdims=True), approx=True)
    pqv = jnp.einsum("bpq,bqd->bpd", alpha.astype(bf16), q.astype(bf16),
                     preferred_element_type=jnp.float32)        # (Bb, Tp, D)

    # beta = softmax over passage positions of the per-row max scores
    # (squeezed 2-D (Bb, Tp) layout: Tp lives in lanes).
    beta_scores = row_max + pbias_ref[...]                      # (Bb, Tp)
    bmax = jnp.max(beta_scores, axis=-1, keepdims=True)
    be = jnp.exp(beta_scores - bmax)
    beta = be * pl.reciprocal(jnp.sum(be, axis=-1, keepdims=True), approx=True)
    qpv = jnp.sum(beta[:, :, None] * p, axis=1)                 # (Bb, D)

    # merge: relu(Linear(4D -> D)) on [p, pqv, p*pqv, p*qpv].
    x0 = p2d
    x1 = pqv.reshape(Bb * Tp, D)
    x2 = (p * pqv).reshape(Bb * Tp, D)
    x3 = (p * qpv[:, None, :]).reshape(Bb * Tp, D)
    if D >= 128:
        # Avoid materializing the (Bb*Tp, 4D) concat at realistic D.
        merged = jnp.dot(x0.astype(bf16), wlin_ref[0 * D:1 * D, :],
                         preferred_element_type=jnp.float32)
        merged += jnp.dot(x1.astype(bf16), wlin_ref[1 * D:2 * D, :],
                          preferred_element_type=jnp.float32)
        merged += jnp.dot(x2.astype(bf16), wlin_ref[2 * D:3 * D, :],
                          preferred_element_type=jnp.float32)
        merged += jnp.dot(x3.astype(bf16), wlin_ref[3 * D:4 * D, :],
                          preferred_element_type=jnp.float32)
    else:
        cat = jnp.concatenate([x0, x1, x2, x3], axis=-1).astype(bf16)
        merged = jnp.dot(cat, wlin_ref[...], preferred_element_type=jnp.float32)
    merged = jnp.maximum(merged + blin_ref[...], 0.0)           # (Bb*Tp, D) f32

    # Hoisted BiLSTM input projection -> precomputed gate pre-activations,
    # lane-dense (8H == 128 for H=16) bf16 output, batch-major.
    gates = jnp.dot(merged.astype(bf16), wih_ref[...],
                    preferred_element_type=jnp.float32) + bih_ref[...]
    out_ref[...] = gates.astype(out_ref.dtype).reshape(out_ref.shape)


def bidaf_attention_gates(passage, question, p_bias, q_bias,
                          w_att_t, diag, w_lin_t, b_lin, wih_all_t, b_ih_all,
                          *, b_block=None, vmem_limit_bytes=None):
    B, Tp, D = passage.shape
    Tq = question.shape[1]
    Ha = w_att_t.shape[1]
    G = wih_all_t.shape[1]                      # 8 * hidden (fwd + bwd gates)
    Bb = _pick_b_block(B) if b_block is None else b_block
    assert B % Bb == 0 and (Bb == B or Bb % 8 == 0)
    # In-kernel (Bb, T, x) <-> (Bb*T, x) reshapes are layout-free when T % 8 == 0.
    assert Tp % 8 == 0 and Tq % 8 == 0
    if vmem_limit_bytes is None:
        vmem_limit_bytes = _default_vmem_limit()
    return pl.pallas_call(
        bidaf_attn_gates_kernel,
        out_shape=jax.ShapeDtypeStruct((B, Tp, G), jnp.bfloat16),
        grid_spec=pltpu.PrefetchScalarGridSpec(
            num_scalar_prefetch=0,
            grid=(B // Bb,),
            in_specs=[
                pl.BlockSpec((Bb, Tp, D), lambda b: (b, 0, 0)),
                pl.BlockSpec((Bb, Tq, D), lambda b: (b, 0, 0)),
                pl.BlockSpec((Bb, Tp), lambda b: (b, 0)),
                pl.BlockSpec((Bb, Tq), lambda b: (b, 0)),
                pl.BlockSpec((D, Ha), lambda b: (0, 0)),
                pl.BlockSpec((1, Ha), lambda b: (0, 0)),
                pl.BlockSpec((4 * D, D), lambda b: (0, 0)),
                pl.BlockSpec((1, D), lambda b: (0, 0)),
                pl.BlockSpec((D, G), lambda b: (0, 0)),
                pl.BlockSpec((1, G), lambda b: (0, 0)),
            ],
            out_specs=pl.BlockSpec((Bb, Tp, G), lambda b: (b, 0, 0)),
        ),
        compiler_params=pltpu.CompilerParams(
            dimension_semantics=("parallel",),
            vmem_limit_bytes=vmem_limit_bytes,
        ),
    )(passage, question, p_bias, q_bias,
      w_att_t.astype(jnp.bfloat16), diag, w_lin_t.astype(jnp.bfloat16),
      b_lin.reshape(1, -1), wih_all_t.astype(jnp.bfloat16), b_ih_all)


# --------------------------------------------------------------------------
# Kernel 2: fused fwd/bwd LSTM recurrence over precomputed gate activations.
# Grid = (batch blocks "parallel", time slabs "arbitrary"); h/c carries live in
# VMEM scratch. gx is batch-major (B, Tp, 8H) bf16; the same array is passed
# twice (forward-time and reversed-time BlockSpecs) so no in-kernel dynamic
# indexing or transposes are needed.
# --------------------------------------------------------------------------
def bilstm_recurrence_kernel(gxf_ref, gxb_ref, whh_ref, outf_ref, outb_ref,
                             h_scr, c_scr):
    Bb, TB, G = gxf_ref.shape
    H2 = h_scr.shape[1]                 # 2H (fwd | bwd)
    H = H2 // 2
    bf16 = jnp.bfloat16

    @pl.when(pl.program_id(1) == 0)
    def _():
        h_scr[...] = jnp.zeros_like(h_scr)
        c_scr[...] = jnp.zeros_like(c_scr)

    whh = whh_ref[...]                  # (2H, 8H) bf16, block-diagonal
    lane = lax.broadcasted_iota(jnp.int32, (1, G), 1)
    take_fwd = (lane % H2) < H          # fwd columns of the gate-interleaved layout

    h_cat = h_scr[...]                  # (Bb, 2H) f32
    c_cat = c_scr[...]
    for j in range(TB):                 # static unroll of the time slab
        gx_f = gxf_ref[:, j, :].astype(jnp.float32)            # time  t0 + j
        gx_b = gxb_ref[:, TB - 1 - j, :].astype(jnp.float32)   # time  T-1-(t0+j)
        g_x = jnp.where(take_fwd, gx_f, gx_b)                  # (Bb, 8H)
        # Single fused recurrent GEMM for both directions.
        g = g_x + jnp.dot(h_cat.astype(bf16), whh,
                          preferred_element_type=jnp.float32)
        # PyTorch gate order i, f, g, o; each slice is [fwd | bwd] (2H wide).
        i_g = jax.nn.sigmoid(g[:, 0 * H2:1 * H2])
        f_g = jax.nn.sigmoid(g[:, 1 * H2:2 * H2])
        g_g = jnp.tanh(g[:, 2 * H2:3 * H2])
        o_g = jax.nn.sigmoid(g[:, 3 * H2:4 * H2])
        c_cat = f_g * c_cat + i_g * g_g
        h_cat = o_g * jnp.tanh(c_cat)
        # Writes land in the VMEM output block (off the recurrence dep chain);
        # HBM writeback is the pipelined per-block DMA.
        outf_ref[:, j, :] = h_cat[:, :H]
        outb_ref[:, TB - 1 - j, :] = h_cat[:, H:]
    h_scr[...] = h_cat
    c_scr[...] = c_cat


def bilstm_recurrence(gx, whh_blk, *, b_block=None, t_block=8,
                      vmem_limit_bytes=None):
    B, T, G = gx.shape
    H2 = whh_blk.shape[0]               # 2H
    H = H2 // 2
    Bb = _pick_b_block(B) if b_block is None else b_block
    assert B % Bb == 0 and (Bb == B or Bb % 8 == 0)
    TB = t_block
    assert T % TB == 0 and (TB == T or TB % 8 == 0)
    nT = T // TB
    if vmem_limit_bytes is None:
        vmem_limit_bytes = _default_vmem_limit()
    return pl.pallas_call(
        bilstm_recurrence_kernel,
        out_shape=(jax.ShapeDtypeStruct((B, T, H), jnp.float32),
                   jax.ShapeDtypeStruct((B, T, H), jnp.float32)),
        grid_spec=pltpu.PrefetchScalarGridSpec(
            num_scalar_prefetch=0,
            grid=(B // Bb, nT),
            in_specs=[
                pl.BlockSpec((Bb, TB, G), lambda b, t: (b, t, 0)),
                pl.BlockSpec((Bb, TB, G), lambda b, t: (b, nT - 1 - t, 0)),
                pl.BlockSpec((H2, 4 * H2), lambda b, t: (0, 0)),
            ],
            out_specs=[
                pl.BlockSpec((Bb, TB, H), lambda b, t: (b, t, 0)),
                pl.BlockSpec((Bb, TB, H), lambda b, t: (b, nT - 1 - t, 0)),
            ],
            scratch_shapes=[pltpu.VMEM((Bb, H2), jnp.float32),
                            pltpu.VMEM((Bb, H2), jnp.float32)],
        ),
        compiler_params=pltpu.CompilerParams(
            dimension_semantics=("parallel", "arbitrary"),
            vmem_limit_bytes=vmem_limit_bytes,
        ),
    )(gx, gx, whh_blk)


# --------------------------------------------------------------------------
# Full BiDAF forward
# --------------------------------------------------------------------------
def bidaf_forward(passage, question, passage_mask, question_mask, prm, *,
                  b_block=None, t_block=8):
    B, Tp, _ = passage.shape
    H = prm["whh_f_t"].shape[0]
    neg = jnp.float32(_NEG_BIG)
    p_bias = jnp.where(passage_mask, neg, 0.0).astype(jnp.float32)   # (B, Tp)
    q_bias = jnp.where(question_mask, neg, 0.0).astype(jnp.float32)  # (B, Tq)

    # Gate-interleaved packing so kernel 2's gate math is 2H-lane contiguous,
    # plus the block-diagonal W_hh for the single fused recurrent GEMM.
    wih_all_t = _interleave_gate_cols(prm["wih_f_t"], prm["wih_b_t"], H)  # (D, 8H)
    b_ih_all = _interleave_gate_cols(prm["b_f"], prm["b_b"], H)           # (1, 8H)
    whh_blk = _block_diag_whh(prm["whh_f_t"], prm["whh_b_t"], H)          # (2H, 8H)

    gates = bidaf_attention_gates(
        passage, question, p_bias, q_bias,
        prm["w_att_t"], prm["diag"], prm["w_lin_t"], prm["b_lin"],
        wih_all_t, b_ih_all, b_block=b_block)       # (B, Tp, 8H) bf16, batch-major

    h_f, h_b = bilstm_recurrence(gates, whh_blk.astype(jnp.bfloat16),
                                 b_block=b_block, t_block=min(t_block, Tp))
    return jnp.concatenate([h_f, h_b], axis=-1)     # (B, Tp, 2H)


# --------------------------------------------------------------------------
# Pure-JAX reference (for correctness check)
# --------------------------------------------------------------------------
def reference_forward(passage, question, passage_mask, question_mask, prm):
    p_rep = jax.nn.relu(passage @ prm["w_att_t"])
    q_rep = jax.nn.relu(question @ prm["w_att_t"])
    scores = jnp.einsum("bph,bqh->bpq", p_rep, q_rep * prm["diag"][None])
    alpha_scores = jnp.where(question_mask[:, None, :], -jnp.inf, scores)
    alpha = jax.nn.softmax(alpha_scores, axis=2)
    pqv = jnp.einsum("bpq,bqd->bpd", alpha, question)
    beta_masked = jnp.max(alpha_scores, axis=-1)
    beta_scores = jnp.where(passage_mask, -jnp.inf, beta_masked)
    beta = jax.nn.softmax(beta_scores, axis=1)
    qpv = jnp.einsum("bp,bpd->bd", beta, passage)[:, None, :]
    cat = jnp.concatenate([passage, pqv, passage * pqv, passage * qpv], axis=-1)
    merged = jax.nn.relu(cat @ prm["w_lin_t"] + prm["b_lin"])

    def lstm_dir(x_tbd, wih_t, whh_t, b, reverse):
        H = whh_t.shape[0]
        h0 = jnp.zeros((x_tbd.shape[1], H), jnp.float32)
        c0 = jnp.zeros_like(h0)

        def step(carry, x_t):
            h, c = carry
            g = x_t @ wih_t + h @ whh_t + b
            i_g = jax.nn.sigmoid(g[:, 0 * H:1 * H])
            f_g = jax.nn.sigmoid(g[:, 1 * H:2 * H])
            g_g = jnp.tanh(g[:, 2 * H:3 * H])
            o_g = jax.nn.sigmoid(g[:, 3 * H:4 * H])
            c = f_g * c + i_g * g_g
            h = o_g * jnp.tanh(c)
            return (h, c), h

        _, ys = lax.scan(step, (h0, c0), x_tbd, reverse=reverse)
        return ys

    x_tbd = jnp.transpose(merged, (1, 0, 2))
    hf = lstm_dir(x_tbd, prm["wih_f_t"], prm["whh_f_t"], prm["b_f"], False)
    hb = lstm_dir(x_tbd, prm["wih_b_t"], prm["whh_b_t"], prm["b_b"], True)
    return jnp.transpose(jnp.concatenate([hf, hb], axis=-1), (1, 0, 2))


# --------------------------------------------------------------------------
if __name__ == "__main__":
    B, Tp, Tq = 2, 8, 8
    D = 32          # input_dim
    Ha = 16         # att_hidden_size
    H = 16          # hidden_size

    key = jax.random.PRNGKey(0)
    ks = jax.random.split(key, 12)

    passage = jax.random.normal(ks[0], (B, Tp, D), jnp.float32)
    question = jax.random.normal(ks[1], (B, Tq, D), jnp.float32)

    # True == padding (mask out); keep at least one valid position per row.
    q_valid = jnp.array([6, 8])
    p_valid = jnp.array([7, 8])
    question_mask = jnp.arange(Tq)[None, :] >= q_valid[:, None]
    passage_mask = jnp.arange(Tp)[None, :] >= p_valid[:, None]

    s = 0.1
    params = {
        # AttentionScore: Linear(D, Ha, bias=False) weight, stored transposed.
        "w_att_t": s * jax.random.normal(ks[2], (D, Ha), jnp.float32),
        # diagonal parameter (similarity_attention=False -> ones(1, Ha)).
        "diag": jnp.ones((1, Ha), jnp.float32),
        # merge Linear(4D, D): weight stored transposed (4D, D), bias (D,).
        "w_lin_t": s * jax.random.normal(ks[3], (4 * D, D), jnp.float32),
        "b_lin": s * jax.random.normal(ks[4], (D,), jnp.float32),
        # StackedBRNN: 1-layer bidirectional LSTM, weights transposed,
        # b = b_ih + b_hh combined.
        "wih_f_t": s * jax.random.normal(ks[5], (D, 4 * H), jnp.float32),
        "whh_f_t": s * jax.random.normal(ks[6], (H, 4 * H), jnp.float32),
        "b_f": s * jax.random.normal(ks[7], (1, 4 * H), jnp.float32),
        "wih_b_t": s * jax.random.normal(ks[8], (D, 4 * H), jnp.float32),
        "whh_b_t": s * jax.random.normal(ks[9], (H, 4 * H), jnp.float32),
        "b_b": s * jax.random.normal(ks[10], (1, 4 * H), jnp.float32),
    }
    # TODO(synk): dropout inside StackedBRNN is omitted (eval-mode semantics).

    out = bidaf_forward(passage, question, passage_mask, question_mask, params)
    out = jax.block_until_ready(out)
    assert out.shape == (B, Tp, 2 * H), out.shape

    ref = reference_forward(passage, question, passage_mask, question_mask, params)
    # bf16 MXU operands + bf16 gate handoff + approx reciprocal -> ~1e-2 abs err.
    err = float(jnp.max(jnp.abs(out - ref)))
    assert err < 3e-2, f"max abs err {err}"

    print("KERNEL_OK")
</pallas_src>

<mosaic_0001>
module attributes {stable_mosaic.version = 11 : i64} {
  func.func @bidaf_attn_gates_kernel(%arg0: i32, %arg1: memref<2x8x32xf32, #tpu.memory_space<vmem>>, %arg2: memref<2x8x32xf32, #tpu.memory_space<vmem>>, %arg3: memref<2x8xf32, #tpu.memory_space<vmem>>, %arg4: memref<2x8xf32, #tpu.memory_space<vmem>>, %arg5: memref<32x16xbf16, #tpu.memory_space<vmem>>, %arg6: memref<1x16xf32, #tpu.memory_space<vmem>>, %arg7: memref<128x32xbf16, #tpu.memory_space<vmem>>, %arg8: memref<1x32xf32, #tpu.memory_space<vmem>>, %arg9: memref<32x128xbf16, #tpu.memory_space<vmem>>, %arg10: memref<1x128xf32, #tpu.memory_space<vmem>>, %arg11: memref<2x8x128xbf16, #tpu.memory_space<vmem>>) attributes {dimension_semantics = [#tpu.dimension_semantics<parallel>], iteration_bounds = array<i64: 1>, scalar_prefetch = 0 : i64, scratch_operands = 0 : i64, tpu.core_type = #tpu.core_type<tc>, window_params = [{transform_indices = @transform_0, window_bounds = array<i64: 2, 8, 32>}, {transform_indices = @transform_1, window_bounds = array<i64: 2, 8, 32>}, {transform_indices = @transform_2, window_bounds = array<i64: 2, 8>}, {transform_indices = @transform_3, window_bounds = array<i64: 2, 8>}, {pipeline_mode = #tpu.pipeline_mode<synchronous>, transform_indices = @transform_4, window_bounds = array<i64: 32, 16>}, {pipeline_mode = #tpu.pipeline_mode<synchronous>, transform_indices = @transform_5, window_bounds = array<i64: 1, 16>}, {pipeline_mode = #tpu.pipeline_mode<synchronous>, transform_indices = @transform_6, window_bounds = array<i64: 128, 32>}, {pipeline_mode = #tpu.pipeline_mode<synchronous>, transform_indices = @transform_7, window_bounds = array<i64: 1, 32>}, {pipeline_mode = #tpu.pipeline_mode<synchronous>, transform_indices = @transform_8, window_bounds = array<i64: 32, 128>}, {pipeline_mode = #tpu.pipeline_mode<synchronous>, transform_indices = @transform_9, window_bounds = array<i64: 1, 128>}, {transform_indices = @transform_10, window_bounds = array<i64: 2, 8, 128>}]} {
    %c0 = arith.constant 0 : index
    %c0_0 = arith.constant 0 : index
    %c0_1 = arith.constant 0 : index
    %0 = vector.load %arg1[%c0, %c0_0, %c0_1] : memref<2x8x32xf32, #tpu.memory_space<vmem>>, vector<2x8x32xf32>
    %c0_2 = arith.constant 0 : index
    %c0_3 = arith.constant 0 : index
    %c0_4 = arith.constant 0 : index
    %1 = vector.load %arg2[%c0_2, %c0_3, %c0_4] : memref<2x8x32xf32, #tpu.memory_space<vmem>>, vector<2x8x32xf32>
    %2 = vector.shape_cast %0 : vector<2x8x32xf32> to vector<16x32xf32>
    %3 = vector.shape_cast %1 : vector<2x8x32xf32> to vector<16x32xf32>
    %c0_5 = arith.constant 0 : index
    %c0_6 = arith.constant 0 : index
    %4 = vector.load %arg5[%c0_5, %c0_6] : memref<32x16xbf16, #tpu.memory_space<vmem>>, vector<32x16xbf16>
    %5 = arith.truncf %2 : vector<16x32xf32> to vector<16x32xbf16>
    %cst = arith.constant dense<0.000000e+00> : vector<16x16xf32>
    %6 = tpu.matmul %5, %4, %cst {dimension_numbers = #tpu.dot_dimension_numbers<[1], [0], [0], [1], [0, 0, 1, 1], [], []>} : vector<16x32xbf16>, vector<32x16xbf16>, vector<16x16xf32> -> vector<16x16xf32>
    %cst_7 = arith.constant 0.000000e+00 : f32
    %7 = vector.broadcast %cst_7 : f32 to vector<16x16xf32>
    %8 = arith.maximumf %6, %7 : vector<16x16xf32>
    %9 = arith.truncf %3 : vector<16x32xf32> to vector<16x32xbf16>
    %cst_8 = arith.constant dense<0.000000e+00> : vector<16x16xf32>
    %10 = tpu.matmul %9, %4, %cst_8 {dimension_numbers = #tpu.dot_dimension_numbers<[1], [0], [0], [1], [0, 0, 1, 1], [], []>} : vector<16x32xbf16>, vector<32x16xbf16>, vector<16x16xf32> -> vector<16x16xf32>
    %cst_9 = arith.constant 0.000000e+00 : f32
    %11 = vector.broadcast %cst_9 : f32 to vector<16x16xf32>
    %12 = arith.maximumf %10, %11 : vector<16x16xf32>
    %c0_10 = arith.constant 0 : index
    %c0_11 = arith.constant 0 : index
    %13 = vector.load %arg6[%c0_10, %c0_11] : memref<1x16xf32, #tpu.memory_space<vmem>>, vector<1x16xf32>
    %14 = vector.broadcast %13 : vector<1x16xf32> to vector<16x16xf32>
    %15 = arith.mulf %12, %14 : vector<16x16xf32>
    %16 = vector.shape_cast %8 : vector<16x16xf32> to vector<2x8x16xf32>
    %17 = arith.truncf %16 : vector<2x8x16xf32> to vector<2x8x16xbf16>
    %18 = vector.shape_cast %15 : vector<16x16xf32> to vector<2x8x16xf32>
    %19 = arith.truncf %18 : vector<2x8x16xf32> to vector<2x8x16xbf16>
    "tpu.trace_start"() <{level = 10 : i32, message = "bph,bqh->bpq"}> : () -> ()
    %cst_12 = arith.constant dense<0.000000e+00> : vector<2x8x8xf32>
    %20 = tpu.matmul %17, %19, %cst_12 {dimension_numbers = #tpu.dot_dimension_numbers<[2], [2], [1], [1], [0, 0, 0, 1, 1, 1], [0], [0]>} : vector<2x8x16xbf16>, vector<2x8x16xbf16>, vector<2x8x8xf32> -> vector<2x8x8xf32>
    "tpu.trace_stop"() : () -> ()
    %c0_13 = arith.constant 0 : index
    %c0_14 = arith.constant 0 : index
    %21 = vector.load %arg4[%c0_13, %c0_14] : memref<2x8xf32, #tpu.memory_space<vmem>>, vector<2x8xf32>
    %22 = vector.shape_cast %21 : vector<2x8xf32> to vector<2x1x8xf32>
    %23 = vector.broadcast %22 : vector<2x1x8xf32> to vector<2x8x8xf32>
    %24 = arith.addf %20, %23 : vector<2x8x8xf32>
    %cst_15 = arith.constant dense<0xFF800000> : vector<2x8xf32>
    %25 = vector.multi_reduction <maximumf>, %24, %cst_15 [2] : vector<2x8x8xf32> to vector<2x8xf32>
    %26 = vector.shape_cast %25 : vector<2x8xf32> to vector<2x8x1xf32>
    %27 = vector.broadcast %26 : vector<2x8x1xf32> to vector<2x8x8xf32>
    %28 = arith.subf %24, %27 : vector<2x8x8xf32>
    %29 = math.exp %28 : vector<2x8x8xf32>
    %cst_16 = arith.constant dense<0.000000e+00> : vector<2x8xf32>
    %30 = vector.multi_reduction <add>, %29, %cst_16 [2] : vector<2x8x8xf32> to vector<2x8xf32>
    %31 = vector.shape_cast %30 : vector<2x8xf32> to vector<2x8x1xf32>
    %32 = tpu.reciprocal %31 {approx = true} : vector<2x8x1xf32> -> vector<2x8x1xf32>
    %33 = vector.broadcast %32 : vector<2x8x1xf32> to vector<2x8x8xf32>
    %34 = arith.mulf %29, %33 : vector<2x8x8xf32>
    %35 = arith.truncf %34 : vector<2x8x8xf32> to vector<2x8x8xbf16>
    %36 = arith.truncf %1 : vector<2x8x32xf32> to vector<2x8x32xbf16>
    "tpu.trace_start"() <{level = 10 : i32, message = "bpq,bqd->bpd"}> : () -> ()
    %cst_17 = arith.constant dense<0.000000e+00> : vector<2x8x32xf32>
    %37 = tpu.matmul %35, %36, %cst_17 {dimension_numbers = #tpu.dot_dimension_numbers<[2], [1], [1], [2], [0, 0, 0, 1, 1, 2], [0], [0]>} : vector<2x8x8xbf16>, vector<2x8x32xbf16>, vector<2x8x32xf32> -> vector<2x8x32xf32>
    "tpu.trace_stop"() : () -> ()
    %c0_18 = arith.constant 0 : index
    %c0_19 = arith.constant 0 : index
    %38 = vector.load %arg3[%c0_18, %c0_19] : memref<2x8xf32, #tpu.memory_space<vmem>>, vector<2x8xf32>
    %39 = arith.addf %25, %38 : vector<2x8xf32>
    %cst_20 = arith.constant dense<0xFF800000> : vector<2xf32>
    %40 = vector.multi_reduction <maximumf>, %39, %cst_20 [1] : vector<2x8xf32> to vector<2xf32>
    %41 = vector.shape_cast %40 : vector<2xf32> to vector<2x1xf32>
    %42 = vector.broadcast %41 : vector<2x1xf32> to vector<2x8xf32>
    %43 = arith.subf %39, %42 : vector<2x8xf32>
    %44 = math.exp %43 : vector<2x8xf32>
    %cst_21 = arith.constant dense<0.000000e+00> : vector<2xf32>
    %45 = vector.multi_reduction <add>, %44, %cst_21 [1] : vector<2x8xf32> to vector<2xf32>
    %46 = vector.shape_cast %45 : vector<2xf32> to vector<2x1xf32>
    %47 = tpu.reciprocal %46 {approx = true} : vector<2x1xf32> -> vector<2x1xf32>
    %48 = vector.broadcast %47 : vector<2x1xf32> to vector<2x8xf32>
    %49 = arith.mulf %44, %48 : vector<2x8xf32>
    %50 = vector.shape_cast %49 : vector<2x8xf32> to vector<2x8x1xf32>
    %51 = vector.broadcast %50 : vector<2x8x1xf32> to vector<2x8x32xf32>
    %52 = arith.mulf %51, %0 : vector<2x8x32xf32>
    %cst_22 = arith.constant dense<0.000000e+00> : vector<2x32xf32>
    %53 = vector.multi_reduction <add>, %52, %cst_22 [1] : vector<2x8x32xf32> to vector<2x32xf32>
    %54 = vector.shape_cast %37 : vector<2x8x32xf32> to vector<16x32xf32>
    %55 = arith.mulf %0, %37 : vector<2x8x32xf32>
    %56 = vector.shape_cast %55 : vector<2x8x32xf32> to vector<16x32xf32>
    %57 = vector.shape_cast %53 : vector<2x32xf32> to vector<2x1x32xf32>
    %58 = vector.broadcast %57 : vector<2x1x32xf32> to vector<2x8x32xf32>
    %59 = arith.mulf %0, %58 : vector<2x8x32xf32>
    %60 = vector.shape_cast %59 : vector<2x8x32xf32> to vector<16x32xf32>
    %61 = tpu.concatenate %2, %54, %56, %60 in 1 : vector<16x32xf32>, vector<16x32xf32>, vector<16x32xf32>, vector<16x32xf32> -> vector<16x128xf32>
    %62 = arith.truncf %61 : vector<16x128xf32> to vector<16x128xbf16>
    %c0_23 = arith.constant 0 : index
    %c0_24 = arith.constant 0 : index
    %63 = vector.load %arg7[%c0_23, %c0_24] : memref<128x32xbf16, #tpu.memory_space<vmem>>, vector<128x32xbf16>
    %cst_25 = arith.constant dense<0.000000e+00> : vector<16x32xf32>
    %64 = tpu.matmul %62, %63, %cst_25 {dimension_numbers = #tpu.dot_dimension_numbers<[1], [0], [0], [1], [0, 0, 1, 1], [], []>} : vector<16x128xbf16>, vector<128x32xbf16>, vector<16x32xf32> -> vector<16x32xf32>
    %c0_26 = arith.constant 0 : index
    %c0_27 = arith.constant 0 : index
    %65 = vector.load %arg8[%c0_26, %c0_27] : memref<1x32xf32, #tpu.memory_space<vmem>>, vector<1x32xf32>
    %66 = vector.broadcast %65 : vector<1x32xf32> to vector<16x32xf32>
    %67 = arith.addf %64, %66 : vector<16x32xf32>
    %cst_28 = arith.constant 0.000000e+00 : f32
    %68 = vector.broadcast %cst_28 : f32 to vector<16x32xf32>
    %69 = arith.maximumf %67, %68 : vector<16x32xf32>
    %70 = arith.truncf %69 : vector<16x32xf32> to vector<16x32xbf16>
    %c0_29 = arith.constant 0 : index
    %c0_30 = arith.constant 0 : index
    %71 = vector.load %arg9[%c0_29, %c0_30] : memref<32x128xbf16, #tpu.memory_space<vmem>>, vector<32x128xbf16>
    %cst_31 = arith.constant dense<0.000000e+00> : vector<16x128xf32>
    %72 = tpu.matmul %70, %71, %cst_31 {dimension_numbers = #tpu.dot_dimension_numbers<[1], [0], [0], [1], [0, 0, 1, 1], [], []>} : vector<16x32xbf16>, vector<32x128xbf16>, vector<16x128xf32> -> vector<16x128xf32>
    %c0_32 = arith.constant 0 : index
    %c0_33 = arith.constant 0 : index
    %73 = vector.load %arg10[%c0_32, %c0_33] : memref<1x128xf32, #tpu.memory_space<vmem>>, vector<1x128xf32>
    %74 = vector.broadcast %73 : vector<1x128xf32> to vector<16x128xf32>
    %75 = arith.addf %72, %74 : vector<16x128xf32>
    %76 = arith.truncf %75 : vector<16x128xf32> to vector<16x128xbf16>
    %77 = vector.shape_cast %76 : vector<16x128xbf16> to vector<2x8x128xbf16>
    %c0_34 = arith.constant 0 : index
    %c0_35 = arith.constant 0 : index
    %c0_36 = arith.constant 0 : index
    %78 = vector.load %arg11[%c0_34, %c0_35, %c0_36] : memref<2x8x128xbf16, #tpu.memory_space<vmem>>, vector<2x8x128xbf16>
    tpu.vector_store %arg11[%c0_34, %c0_35, %c0_36], %77 {strides = array<i32>} : memref<2x8x128xbf16, #tpu.memory_space<vmem>>, vector<2x8x128xbf16>,
    return
  }
  func.func @transform_0(%arg0: i32) -> (i32, i32, i32) {
    %c0_i32 = arith.constant 0 : i32
    %c0_i32_0 = arith.constant 0 : i32
    %c0_i32_1 = arith.constant 0 : i32
    return %arg0, %c0_i32, %c0_i32_0 : i32, i32, i32
  }
  func.func @transform_1(%arg0: i32) -> (i32, i32, i32) {
    %c0_i32 = arith.constant 0 : i32
    %c0_i32_0 = arith.constant 0 : i32
    %c0_i32_1 = arith.constant 0 : i32
    return %arg0, %c0_i32, %c0_i32_0 : i32, i32, i32
  }
  func.func @transform_2(%arg0: i32) -> (i32, i32) {
    %c0_i32 = arith.constant 0 : i32
    %c0_i32_0 = arith.constant 0 : i32
    return %arg0, %c0_i32 : i32, i32
  }
  func.func @transform_3(%arg0: i32) -> (i32, i32) {
    %c0_i32 = arith.constant 0 : i32
    %c0_i32_0 = arith.constant 0 : i32
    return %arg0, %c0_i32 : i32, i32
  }
  func.func @transform_4(%arg0: i32) -> (i32, i32) {
    %c0_i32 = arith.constant 0 : i32
    %c0_i32_0 = arith.constant 0 : i32
    %c0_i32_1 = arith.constant 0 : i32
    return %c0_i32, %c0_i32_0 : i32, i32
  }
  func.func @transform_5(%arg0: i32) -> (i32, i32) {
    %c0_i32 = arith.constant 0 : i32
    %c0_i32_0 = arith.constant 0 : i32
    %c0_i32_1 = arith.constant 0 : i32
    return %c0_i32, %c0_i32_0 : i32, i32
  }
  func.func @transform_6(%arg0: i32) -> (i32, i32) {
    %c0_i32 = arith.constant 0 : i32
    %c0_i32_0 = arith.constant 0 : i32
    %c0_i32_1 = arith.constant 0 : i32
    return %c0_i32, %c0_i32_0 : i32, i32
  }
  func.func @transform_7(%arg0: i32) -> (i32, i32) {
    %c0_i32 = arith.constant 0 : i32
    %c0_i32_0 = arith.constant 0 : i32
    %c0_i32_1 = arith.constant 0 : i32
    return %c0_i32, %c0_i32_0 : i32, i32
  }
  func.func @transform_8(%arg0: i32) -> (i32, i32) {
    %c0_i32 = arith.constant 0 : i32
    %c0_i32_0 = arith.constant 0 : i32
    %c0_i32_1 = arith.constant 0 : i32
    return %c0_i32, %c0_i32_0 : i32, i32
  }
  func.func @transform_9(%arg0: i32) -> (i32, i32) {
    %c0_i32 = arith.constant 0 : i32
    %c0_i32_0 = arith.constant 0 : i32
    %c0_i32_1 = arith.constant 0 : i32
    return %c0_i32, %c0_i32_0 : i32, i32
  }
  func.func @transform_10(%arg0: i32) -> (i32, i32, i32) {
    %c0_i32 = arith.constant 0 : i32
    %c0_i32_0 = arith.constant 0 : i32
    %c0_i32_1 = arith.constant 0 : i32
    return %arg0, %c0_i32, %c0_i32_0 : i32, i32, i32
  }
}

</mosaic_0001>

<llo_original>
// kernel: tpu_custom_call.1
$region0: #{tpu_custom_call.1}
  #allocation0 [shape = 'u32[]', space=smem, size = 0x4, offset = 0x4, fixed_abs, tag = 'smem constant byte address 0x4 - core index']
  #allocation1 [shape = 'u32[144,128]{1,0:T(1,128)}', space=vmem, size = 0x12000, scoped, tag = 'internal scratch']
  %s0 = inlined_call_operand.hbm [shape: f32[2,8,32], index: 0, kind: input, shape index: {}]
  %s1 = inlined_call_operand.hbm [shape: f32[2,8,32], index: 1, kind: input, shape index: {}]
  %s2 = inlined_call_operand.hbm [shape: f32[2,8], index: 2, kind: input, shape index: {}]
  %s3 = inlined_call_operand.hbm [shape: f32[2,8], index: 3, kind: input, shape index: {}]
  %s4 = inlined_call_operand.hbm [shape: bf16[32,16], index: 4, kind: input, shape index: {}]
  %s5 = inlined_call_operand.hbm [shape: f32[1,16], index: 5, kind: input, shape index: {}]
  %s6 = inlined_call_operand.hbm [shape: bf16[128,32], index: 6, kind: input, shape index: {}]
  %s7 = inlined_call_operand.hbm [shape: f32[1,32], index: 7, kind: input, shape index: {}]
  %s8 = inlined_call_operand.hbm [shape: bf16[32,128], index: 8, kind: input, shape index: {}]
  %s9 = inlined_call_operand.hbm [shape: f32[1,128], index: 9, kind: input, shape index: {}]
  %s10 = inlined_call_operand.hbm [shape: bf16[2,8,128], index: 10, kind: output, shape index: {}]
  %s11 = sld [smem:[#allocation0]]
  $region90: #{tpu_custom_call.1} parent=0
    _
  %s13 = ssub.s32 1, %s11
  %s14 = scalar_select 0, %s13, %s11
  $region1: #{tpu_custom_call.1} parent=0
    #allocation2 [shape = 'u8[8192]{0}', space=vmem, size = 0x2000, scoped, tag = 'input window, operand 0, single buffered']
    #allocation3 [shape = 's32[1]{0}', space=sflag, size = 0x4, scoped, tag = 'scoped memory for tpu_custom_call.1']
    #allocation4 [shape = 's32[1]{0}', space=sflag, size = 0x4, scoped, tag = 'scoped memory for tpu_custom_call.1']
    #allocation5 [shape = 'u8[8192]{0}', space=vmem, size = 0x2000, scoped, tag = 'input window, operand 1, single buffered']
    #allocation6 [shape = 's32[1]{0}', space=sflag, size = 0x4, scoped, tag = 'scoped memory for tpu_custom_call.1']
    #allocation7 [shape = 'u8[1024]{0}', space=vmem, size = 0x400, scoped, tag = 'input window, operand 2, single buffered']
    #allocation8 [shape = 'u8[1024]{0}', space=vmem, size = 0x400, scoped, tag = 'input window, operand 3, single buffered']
    #allocation9 [shape = 's32[1]{0}', space=sflag, size = 0x4, scoped, tag = 'scoped memory for tpu_custom_call.1']
    #allocation10 [shape = 'u8[8192]{0}', space=vmem, size = 0x2000, scoped, tag = 'input window, operand 4, single buffered']
    #allocation11 [shape = 'u8[512]{0}', space=vmem, size = 0x400, scoped, tag = 'input window, operand 5, single buffered']
    #allocation12 [shape = 's32[1]{0}', space=sflag, size = 0x4, scoped, tag = 'scoped memory for tpu_custom_call.1']
    #allocation13 [shape = 'u8[32768]{0}', space=vmem, size = 0x8000, scoped, tag = 'input window, operand 6, single buffered']
    #allocation14 [shape = 'u8[512]{0}', space=vmem, size = 0x400, scoped, tag = 'input window, operand 7, single buffered']
    #allocation15 [shape = 's32[1]{0}', space=sflag, size = 0x4, scoped, tag = 'scoped memory for tpu_custom_call.1']
    #allocation16 [shape = 'u8[8192]{0}', space=vmem, size = 0x2000, scoped, tag = 'input window, operand 8, single buffered']
    #allocation17 [shape = 'u8[512]{0}', space=vmem, size = 0x400, scoped, tag = 'input window, operand 9, single buffered']
    #allocation18 [shape = 's32[1]{0}', space=sflag, size = 0x4, scoped, tag = 'scoped memory for tpu_custom_call.1']
    #allocation19 [shape = 'u8[4096]{0}', space=vmem, size = 0x1000, scoped, tag = 'output window, operand 0, single buffered']
    %15 = vsyncpa [#allocation3], 0
    %16 = vsyncpa [#allocation6], 0
    %17 = vsyncpa [#allocation9], 0
    %18 = vsyncpa [#allocation12], 0
    %19 = vsyncpa [#allocation15], 0
    %20 = vsyncpa [#allocation18], 0
    %21 = vsyncpa [#allocation4], 0
    // Predicated region
    $region2: #{tpu_custom_call.1} parent=1 // pred_check
      _
    $region3: #{tpu_custom_call.1} parent=1 // pred_check_branch
      %23 = sbr.rel (0) target = $region5
    $region4: #{tpu_custom_call.1} parent=1 // pred_region
      %s25 = ssub.s32 256, 256
      %26 = vsyncadd [#allocation3], %s25
      %s27 = sshll.u32 [#allocation2], 4
      %s28 = int_to_ptr.vmem [resolvable:$true] %s27
      %33 = dma.hbm_to_vmem [thread:$0]  %s0, 256, %s28, [#allocation3], 128, 128, 8
    $region5: #{tpu_custom_call.1} parent=1 // pred_fallthru
      _
    // Predicated region
    $region6: #{tpu_custom_call.1} parent=1 // pred_check
      _
    $region7: #{tpu_custom_call.1} parent=1 // pred_check_branch
      %35 = sbr.rel (0) target = $region9
    $region8: #{tpu_custom_call.1} parent=1 // pred_region
      %s37 = ssub.s32 256, 256
      %38 = vsyncadd [#allocation6], %s37
      %s39 = sshll.u32 [#allocation5], 4
      %s40 = int_to_ptr.vmem [resolvable:$true] %s39
      %45 = dma.hbm_to_vmem [thread:$0]  %s1, 256, %s40, [#allocation6], 128, 128, 8
    $region9: #{tpu_custom_call.1} parent=1 // pred_fallthru
      _
    // Predicated region
    $region10: #{tpu_custom_call.1} parent=1 // pred_check
      _
    $region11: #{tpu_custom_call.1} parent=1 // pred_check_branch
      %47 = sbr.rel (0) target = $region13
    $region12: #{tpu_custom_call.1} parent=1 // pred_region
      %s49 = ssub.s32 32, 32
      %50 = vsyncadd [#allocation6], %s49
      %s52 = sshll.u32 [#allocation7], 4
      %s53 = int_to_ptr.vmem [resolvable:$true] %s52
      %55 = dma.hbm_to_vmem [thread:$0]  %s2, 32, %s53, [#allocation6]
    $region13: #{tpu_custom_call.1} parent=1 // pred_fallthru
      _
    // Predicated region
    $region14: #{tpu_custom_call.1} parent=1 // pred_check
      _
    $region15: #{tpu_custom_call.1} parent=1 // pred_check_branch
      %57 = sbr.rel (0) target = $region17
    $region16: #{tpu_custom_call.1} parent=1 // pred_region
      %s59 = ssub.s32 32, 32
      %60 = vsyncadd [#allocation9], %s59
      %s62 = sshll.u32 [#allocation8], 4
      %s63 = int_to_ptr.vmem [resolvable:$true] %s62
      %65 = dma.hbm_to_vmem [thread:$0]  %s3, 32, %s63, [#allocation9]
    $region17: #{tpu_custom_call.1} parent=1 // pred_fallthru
      _
    // Predicated region
    $region18: #{tpu_custom_call.1} parent=1 // pred_check
      _
    $region19: #{tpu_custom_call.1} parent=1 // pred_check_branch
      %67 = sbr.rel (0) target = $region21
    $region20: #{tpu_custom_call.1} parent=1 // pred_region
      %s69 = ssub.s32 256, 256
      %70 = vsyncadd [#allocation9], %s69
      %s71 = sshll.u32 [#allocation10], 4
      %s72 = int_to_ptr.vmem [resolvable:$true] %s71
      %77 = dma.hbm_to_vmem [thread:$0]  %s4, 256, %s72, [#allocation9], 64, 64, 4
    $region21: #{tpu_custom_call.1} parent=1 // pred_fallthru
      _
    // Predicated region
    $region22: #{tpu_custom_call.1} parent=1 // pred_check
      _
    $region23: #{tpu_custom_call.1} parent=1 // pred_check_branch
      %79 = sbr.rel (0) target = $region25
    $region24: #{tpu_custom_call.1} parent=1 // pred_region
      %s81 = ssub.s32 16, 16
      %82 = vsyncadd [#allocation12], %s81
      %s84 = sshll.u32 [#allocation11], 4
      %s85 = int_to_ptr.vmem [resolvable:$true] %s84
      %87 = dma.hbm_to_vmem [thread:$0]  %s5, 16, %s85, [#allocation12]
    $region25: #{tpu_custom_call.1} parent=1 // pred_fallthru
      _
    // Predicated region
    $region26: #{tpu_custom_call.1} parent=1 // pred_check
      _
    $region27: #{tpu_custom_call.1} parent=1 // pred_check_branch
      %89 = sbr.rel (0) target = $region29
    $region28: #{tpu_custom_call.1} parent=1 // pred_region
      %s91 = ssub.s32 1024, 1024
      %92 = vsyncadd [#allocation12], %s91
      %s93 = sshll.u32 [#allocation13], 4
      %s94 = int_to_ptr.vmem [resolvable:$true] %s93
      %99 = dma.hbm_to_vmem [thread:$0]  %s6, 1024, %s94, [#allocation12], 64, 64, 4
    $region29: #{tpu_custom_call.1} parent=1 // pred_fallthru
      _
    // Predicated region
    $region30: #{tpu_custom_call.1} parent=1 // pred_check
      _
    $region31: #{tpu_custom_call.1} parent=1 // pred_check_branch
      %101 = sbr.rel (0) target = $region33
    $region32: #{tpu_custom_call.1} parent=1 // pred_region
      %s103 = ssub.s32 16, 16
      %104 = vsyncadd [#allocation15], %s103
      %s106 = sshll.u32 [#allocation14], 4
      %s107 = int_to_ptr.vmem [resolvable:$true] %s106
      %109 = dma.hbm_to_vmem [thread:$0]  %s7, 16, %s107, [#allocation15]
    $region33: #{tpu_custom_call.1} parent=1 // pred_fallthru
      _
    // Predicated region
    $region34: #{tpu_custom_call.1} parent=1 // pred_check
      _
    $region35: #{tpu_custom_call.1} parent=1 // pred_check_branch
      %111 = sbr.rel (0) target = $region37
    $region36: #{tpu_custom_call.1} parent=1 // pred_region
      %s113 = ssub.s32 256, 256
      %114 = vsyncadd [#allocation15], %s113
      %s115 = sshll.u32 [#allocation16], 4
      %s116 = int_to_ptr.vmem [resolvable:$true] %s115
      %121 = dma.hbm_to_vmem [thread:$0]  %s8, 256, %s116, [#allocation15], 64, 64, 4
    $region37: #{tpu_custom_call.1} parent=1 // pred_fallthru
      _
    // Predicated region
    $region38: #{tpu_custom_call.1} parent=1 // pred_check
      _
    $region39: #{tpu_custom_call.1} parent=1 // pred_check_branch
      %123 = sbr.rel (0) target = $region41
    $region40: #{tpu_custom_call.1} parent=1 // pred_region
      %s125 = ssub.s32 16, 16
      %126 = vsyncadd [#allocation18], %s125
      %s128 = sshll.u32 [#allocation17], 4
      %s129 = int_to_ptr.vmem [resolvable:$true] %s128
      %131 = dma.hbm_to_vmem [thread:$0]  %s9, 16, %s129, [#allocation18]
    $region41: #{tpu_custom_call.1} parent=1 // pred_fallthru
      _
    // Predicated region
    $region42: #{tpu_custom_call.1} parent=1 // pred_check
      _
    $region43: #{tpu_custom_call.1} parent=1 // pred_check_branch
      %133 = sbr.rel (0) target = $region45
    $region44: #{tpu_custom_call.1} parent=1 // pred_region
      %134 = dma.done [#allocation3], 256
    $region45: #{tpu_custom_call.1} parent=1 // pred_fallthru
      _
    // Predicated region
    $region46: #{tpu_custom_call.1} parent=1 // pred_check
      _
    $region47: #{tpu_custom_call.1} parent=1 // pred_check_branch
      %136 = sbr.rel (0) target = $region49
    $region48: #{tpu_custom_call.1} parent=1 // pred_region
      %137 = dma.done [#allocation6], 256
    $region49: #{tpu_custom_call.1} parent=1 // pred_fallthru
      _
    // Predicated region
    $region50: #{tpu_custom_call.1} parent=1 // pred_check
      _
    $region51: #{tpu_custom_call.1} parent=1 // pred_check_branch
      %139 = sbr.rel (0) target = $region53
    $region52: #{tpu_custom_call.1} parent=1 // pred_region
      %140 = dma.done [#allocation6], 32
    $region53: #{tpu_custom_call.1} parent=1 // pred_fallthru
      _
    // Predicated region
    $region54: #{tpu_custom_call.1} parent=1 // pred_check
      _
    $region55: #{tpu_custom_call.1} parent=1 // pred_check_branch
      %142 = sbr.rel (0) target = $region57
    $region56: #{tpu_custom_call.1} parent=1 // pred_region
      %143 = dma.done [#allocation9], 32
    $region57: #{tpu_custom_call.1} parent=1 // pred_fallthru
      _
    // Predicated region
    $region58: #{tpu_custom_call.1} parent=1 // pred_check
      _
    $region59: #{tpu_custom_call.1} parent=1 // pred_check_branch
      %145 = sbr.rel (0) target = $region61
    $region60: #{tpu_custom_call.1} parent=1 // pred_region
      %146 = dma.done [#allocation9], 256
    $region61: #{tpu_custom_call.1} parent=1 // pred_fallthru
      _
    // Predicated region
    $region62: #{tpu_custom_call.1} parent=1 // pred_check
      _
    $region63: #{tpu_custom_call.1} parent=1 // pred_check_branch
      %148 = sbr.rel (0) target = $region65
    $region64: #{tpu_custom_call.1} parent=1 // pred_region
      %149 = dma.done [#allocation12], 16
    $region65: #{tpu_custom_call.1} parent=1 // pred_fallthru
      _
    // Predicated region
    $region66: #{tpu_custom_call.1} parent=1 // pred_check
      _
    $region67: #{tpu_custom_call.1} parent=1 // pred_check_branch
      %151 = sbr.rel (0) target = $region69
    $region68: #{tpu_custom_call.1} parent=1 // pred_region
      %152 = dma.done [#allocation12], 1024
    $region69: #{tpu_custom_call.1} parent=1 // pred_fallthru
      _
    // Predicated region
    $region70: #{tpu_custom_call.1} parent=1 // pred_check
      _
    $region71: #{tpu_custom_call.1} parent=1 // pred_check_branch
      %154 = sbr.rel (0) target = $region73
    $region72: #{tpu_custom_call.1} parent=1 // pred_region
      %155 = dma.done [#allocation15], 16
    $region73: #{tpu_custom_call.1} parent=1 // pred_fallthru
      _
    // Predicated region
    $region74: #{tpu_custom_call.1} parent=1 // pred_check
      _
    $region75: #{tpu_custom_call.1} parent=1 // pred_check_branch
      %157 = sbr.rel (0) target = $region77
    $region76: #{tpu_custom_call.1} parent=1 // pred_region
      %158 = dma.done [#allocation15], 256
    $region77: #{tpu_custom_call.1} parent=1 // pred_fallthru
      _
    // Predicated region
    $region78: #{tpu_custom_call.1} parent=1 // pred_check
      _
    $region79: #{tpu_custom_call.1} parent=1 // pred_check_branch
      %160 = sbr.rel (0) target = $region81
    $region80: #{tpu_custom_call.1} parent=1 // pred_region
      %161 = dma.done [#allocation18], 16
    $region81: #{tpu_custom_call.1} parent=1 // pred_fallthru
      _
    %v163 = vld [vmem:[#allocation2] sm:$0xff]
    %v164 = vld [vmem:[#allocation2 + $0x8] sm:$0xff]
    %v165 = vld [vmem:[#allocation5] sm:$0xff]
    %v166 = vld [vmem:[#allocation5 + $0x8] sm:$0xff]
    %v167 = vld [vmem:[#allocation10] sm:$0xf]
    %v168 = vld [vmem:[#allocation10 + $0x4] sm:$0xf]
    %v169 = vld [vmem:[#allocation10 + $0x8] sm:$0xf]
    %v170 = vld [vmem:[#allocation10 + $0xc] sm:$0xf]
    %v171 = vpack.c.bf16 %v164, %v163
    %v176 = vunpack.c.l.b16 %v167
    %v177 = vunpack.c.l.b16 %v168
    %v178 = vunpack.c.l.b16 %v169
    %v179 = vunpack.c.l.b16 %v170
    %v180 = vpack.c.b16 %v177, %v176
    %v181 = vpack.c.b16 %v179, %v178
    %vm184 = vcmask 261120
    %v186 = vsel %vm184, %v171, 0
    %188 = vmatprep.subr.bf16.mxu0 0
    %189 = vmatpush1.bf16.msra.mxu0 %v180
    %190 = vmatprep.subr.bf16.mxu0 0
    %191 = vmatpush1.bf16.msra.mxu0 %v181
    %192 = vmatprep.subr.bf16.mxu0 0
    %193 = vmatpush1.bf16.msra.mxu0 0
    %194 = vmatprep.subr.bf16.mxu0 0
    %195 = vmatpush1.bf16.msra.mxu0 0
    %196 = vmatprep.subr.bf16.mxu0 0
    %197 = vmatpush1.bf16.msra.mxu0 0
    %198 = vmatprep.subr.bf16.mxu0 0
    %199 = vmatpush1.bf16.msra.mxu0 0
    %200 = vmatprep.subr.bf16.mxu0 0
    %201 = vmatpush1.bf16.msra.mxu0 0
    %202 = vmatprep.subr.bf16.mxu0 0
    %203 = vmatpush1.bf16.msra.mxu0 0
    %204 = vmatprep.subr.bf16.mxu0 0
    %205 = vmatpush1.bf16.msra.mxu0 0
    %206 = vmatprep.subr.bf16.mxu0 0
    %207 = vmatpush1.bf16.msra.mxu0 0
    %208 = vmatprep.subr.bf16.mxu0 0
    %209 = vmatpush1.bf16.msra.mxu0 0
    %210 = vmatprep.subr.bf16.mxu0 0
    %211 = vmatpush1.bf16.msra.mxu0 0
    %212 = vmatprep.subr.bf16.mxu0 0
    %213 = vmatpush1.bf16.msra.mxu0 0
    %214 = vmatprep.subr.bf16.mxu0 0
    %215 = vmatpush1.bf16.msra.mxu0 0
    %216 = vmatprep.subr.bf16.mxu0 0
    %217 = vmatpush1.bf16.msra.mxu0 0
    %218 = vmatprep.subr.bf16.mxu0 0
    %219 = vmatpush1.bf16.msra.mxu0 0
    %220 = vmatprep.mubr.bf16.mxu0 0
    %221 = vmatmul.mubr.bf16.gmra.mrb[0].mxu0 %v186
    %v222 = vpop.f32.mrb[0].mxu0
    %v223 = vadd.f32 0.0, %v222
    %v224 = vpop.f32.mrb[0].mxu0
    %v225 = vpop.f32.mrb[0].mxu0
    %v226 = vadd.f32 0.0, %v225
    %v227 = vpop.f32.mrb[0].mxu0
    %228 = vdwg.mxu0
    %v229 = vmax.f32 %v223, 0.0
    %v230 = vmax.f32 %v226, 0.0
    %v231 = vpack.c.bf16 %v166, %v165
    %v233 = vsel %vm184, %v231, 0
    %235 = vmatprep.subr.bf16.mxu0 0
    %236 = vmatpush1.bf16.msra.mxu0 %v180
    %237 = vmatprep.subr.bf16.mxu0 0
    %238 = vmatpush1.bf16.msra.mxu0 %v181
    %239 = vmatprep.subr.bf16.mxu0 0
    %240 = vmatpush1.bf16.msra.mxu0 0
    %241 = vmatprep.subr.bf16.mxu0 0
    %242 = vmatpush1.bf16.msra.mxu0 0
    %243 = vmatprep.subr.bf16.mxu0 0
    %244 = vmatpush1.bf16.msra.mxu0 0
    %245 = vmatprep.subr.bf16.mxu0 0
    %246 = vmatpush1.bf16.msra.mxu0 0
    %247 = vmatprep.subr.bf16.mxu0 0
    %248 = vmatpush1.bf16.msra.mxu0 0
    %249 = vmatprep.subr.bf16.mxu0 0
    %250 = vmatpush1.bf16.msra.mxu0 0
    %251 = vmatprep.subr.bf16.mxu0 0
    %252 = vmatpush1.bf16.msra.mxu0 0
    %253 = vmatprep.subr.bf16.mxu0 0
    %254 = vmatpush1.bf16.msra.mxu0 0
    %255 = vmatprep.subr.bf16.mxu0 0
    %256 = vmatpush1.bf16.msra.mxu0 0
    %257 = vmatprep.subr.bf16.mxu0 0
    %258 = vmatpush1.bf16.msra.mxu0 0
    %259 = vmatprep.subr.bf16.mxu0 0
    %260 = vmatpush1.bf16.msra.mxu0 0
    %261 = vmatprep.subr.bf16.mxu0 0
    %262 = vmatpush1.bf16.msra.mxu0 0
    %263 = vmatprep.subr.bf16.mxu0 0
    %264 = vmatpush1.bf16.msra.mxu0 0
    %265 = vmatprep.subr.bf16.mxu0 0
    %266 = vmatpush1.bf16.msra.mxu0 0
    %267 = vmatprep.mubr.bf16.mxu0 0
    %268 = vmatmul.mubr.bf16.gmra.mrb[0].mxu0 %v233
    %v269 = vpop.f32.mrb[0].mxu0
    %v270 = vadd.f32 0.0, %v269
    %v271 = vpop.f32.mrb[0].mxu0
    %v272 = vpop.f32.mrb[0].mxu0
    %v273 = vadd.f32 0.0, %v272
    %v274 = vpop.f32.mrb[0].mxu0
    %275 = vdwg.mxu0
    %v276 = vmax.f32 %v270, 0.0
    %v277 = vmax.f32 %v273, 0.0
    %v278 = vld [vmem:[#allocation11] sm:$0x1]
    %v280 = vlaneseq
    %v281 = vshrl.u32 %v280, 7
    %v282 = vsub.s32 0, %v281
    %v283 = vrot.slane %v278, %v282
    %v285 = vmul.f32 %v276, %v283
    %v286 = vmul.f32 %v277, %v283
    %v287 = vpack.c.bf16 %v229, %v229
    %v288 = vpack.c.bf16 %v230, %v230
    %v289 = vpack.c.bf16 %v285, %v285
    %v290 = vpack.c.bf16 %v286, %v286
    %v291 = vld [vmem:[#allocation8] sm:$0x3]
    %v294 = vunpack.c.l.s4 1966171168
    %v295 = vunpack.c.0.s8 %v294
    %v296 = vlaneseq
    %v297 = vshrl.u32 %v296, 7
    %v298 = vsub.s32 %v295, %v297
    %v299 = vrot.slane %v291, %v298
    %v300 = vcombine.high %v299, %v299
    %v302 = vunpack.c.l.s4 1966171168
    %v303 = vunpack.c.0.s8 %v302
    %v304 = vlaneseq
    %v305 = vshrl.u32 %v304, 7
    %v306 = vsub.s32 %v303, %v305
    %v307 = vrot.slane %v299, %v306
    %v309 = vunpack.c.l.s4 1966171168
    %v310 = vunpack.c.0.s8 %v309
    %v311 = vlaneseq
    %v312 = vshrl.u32 %v311, 7
    %v313 = vsub.s32 %v310, %v312
    %v314 = vrot.slane %v300, %v313
    %v315 = vlaneseq
    %v316 = vshrl.u32 %v315, 7
    %v317 = vsub.s32 0, %v316
    %v318 = vrot.slane %v307, %v317
    %v319 = vlaneseq
    %v320 = vshrl.u32 %v319, 7
    %v321 = vsub.s32 0, %v320
    %v322 = vrot.slane %v314, %v321
    %vm325 = vcmask 130048
    %v327 = vsel %vm325, %v287, 0
    %v330 = vsel %vm325, %v289, 0
    %332 = vmatprep.subr.bf16.mxu0 0
    %333 = vmatpush1.bf16.xpose.msra.mxu0 %v330
    %334 = vmatprep.subr.bf16.mxu0 0
    %335 = vmatpush1.bf16.xpose.msra.mxu0 0
    %336 = vmatprep.subr.bf16.mxu0 0
    %337 = vmatpush1.bf16.xpose.msra.mxu0 0
    %338 = vmatprep.subr.bf16.mxu0 0
    %339 = vmatpush1.bf16.xpose.msra.mxu0 0
    %340 = vmatprep.subr.bf16.mxu0 0
    %341 = vmatpush1.bf16.xpose.msra.mxu0 0
    %342 = vmatprep.subr.bf16.mxu0 0
    %343 = vmatpush1.bf16.xpose.msra.mxu0 0
    %344 = vmatprep.subr.bf16.mxu0 0
    %345 = vmatpush1.bf16.xpose.msra.mxu0 0
    %346 = vmatprep.subr.bf16.mxu0 0
    %347 = vmatpush1.bf16.xpose.msra.mxu0 0
    %348 = vmatprep.subr.bf16.mxu0 0
    %349 = vmatpush1.bf16.xpose.msra.mxu0 0
    %350 = vmatprep.subr.bf16.mxu0 0
    %351 = vmatpush1.bf16.xpose.msra.mxu0 0
    %352 = vmatprep.subr.bf16.mxu0 0
    %353 = vmatpush1.bf16.xpose.msra.mxu0 0
    %354 = vmatprep.subr.bf16.mxu0 0
    %355 = vmatpush1.bf16.xpose.msra.mxu0 0
    %356 = vmatprep.subr.bf16.mxu0 0
    %357 = vmatpush1.bf16.xpose.msra.mxu0 0
    %358 = vmatprep.subr.bf16.mxu0 0
    %359 = vmatpush1.bf16.xpose.msra.mxu0 0
    %360 = vmatprep.subr.bf16.mxu0 0
    %361 = vmatpush1.bf16.xpose.msra.mxu0 0
    %362 = vmatprep.subr.bf16.mxu0 0
    %363 = vmatpush1.bf16.xpose.msra.mxu0 0
    %364 = vmatprep.mubr.bf16.mxu0 0
    %365 = vmatmul.mubr.bf16.gmra.mrb[0].mxu0 %v327
    %v366 = vpop.f32.mrb[0].mxu0
    %v367 = vadd.f32 %v318, %v366
    %v368 = vpop.f32.mrb[0].mxu0
    %v369 = vpop.f32.mrb[0].mxu0
    %v370 = vpop.f32.mrb[0].mxu0
    %371 = vdwg.mxu0
    %v373 = vsel %vm325, %v288, 0
    %v376 = vsel %vm325, %v290, 0
    %378 = vmatprep.subr.bf16.mxu0 0
    %379 = vmatpush1.bf16.xpose.msra.mxu0 %v376
    %380 = vmatprep.subr.bf16.mxu0 0
    %381 = vmatpush1.bf16.xpose.msra.mxu0 0
    %382 = vmatprep.subr.bf16.mxu0 0
    %383 = vmatpush1.bf16.xpose.msra.mxu0 0
    %384 = vmatprep.subr.bf16.mxu0 0
    %385 = vmatpush1.bf16.xpose.msra.mxu0 0
    %386 = vmatprep.subr.bf16.mxu0 0
    %387 = vmatpush1.bf16.xpose.msra.mxu0 0
    %388 = vmatprep.subr.bf16.mxu0 0
    %389 = vmatpush1.bf16.xpose.msra.mxu0 0
    %390 = vmatprep.subr.bf16.mxu0 0
    %391 = vmatpush1.bf16.xpose.msra.mxu0 0
    %392 = vmatprep.subr.bf16.mxu0 0
    %393 = vmatpush1.bf16.xpose.msra.mxu0 0
    %394 = vmatprep.subr.bf16.mxu0 0
    %395 = vmatpush1.bf16.xpose.msra.mxu0 0
    %396 = vmatprep.subr.bf16.mxu0 0
    %397 = vmatpush1.bf16.xpose.msra.mxu0 0
    %398 = vmatprep.subr.bf16.mxu0 0
    %399 = vmatpush1.bf16.xpose.msra.mxu0 0
    %400 = vmatprep.subr.bf16.mxu0 0
    %401 = vmatpush1.bf16.xpose.msra.mxu0 0
    %402 = vmatprep.subr.bf16.mxu0 0
    %403 = vmatpush1.bf16.xpose.msra.mxu0 0
    %404 = vmatprep.subr.bf16.mxu0 0
    %405 = vmatpush1.bf16.xpose.msra.mxu0 0
    %406 = vmatprep.subr.bf16.mxu0 0
    %407 = vmatpush1.bf16.xpose.msra.mxu0 0
    %408 = vmatprep.subr.bf16.mxu0 0
    %409 = vmatpush1.bf16.xpose.msra.mxu0 0
    %410 = vmatprep.mubr.bf16.mxu0 0
    %411 = vmatmul.mubr.bf16.gmra.mrb[0].mxu0 %v373
    %v412 = vpop.f32.mrb[0].mxu0
    %v413 = vadd.f32 %v322, %v412
    %v414 = vpop.f32.mrb[0].mxu0
    %v415 = vpop.f32.mrb[0].mxu0
    %v416 = vpop.f32.mrb[0].mxu0
    %417 = vdwg.mxu0
    %vm418 = vcmask 64512
    %v419 = vsel %vm418, %v367, -inf
    %420 = vmax.xlane.f32.xlu0 %v419
    %v421 = vpop.xlane.xlu0 %420
    %v422 = vsel %vm418, %v413, -inf
    %423 = vmax.xlane.f32.xlu0 %v422
    %v424 = vpop.xlane.xlu0 %423
    %v425 = vsub.f32 %v367, %v421
    %v426 = vsub.f32 %v413, %v424
    %v427 = vmul.f32 %v425, 1.442695
    %v428 = vpow.pop %v427
    %v429 = vmul.f32 %v426, 1.442695
    %v430 = vpow.pop %v429
    %v431 = vsel %vm418, %v428, 0.0
    %432 = vadd.xlane.f32.xlu0 %v431
    %v433 = vpop.xlane.xlu0 %432
    %v434 = vsel %vm418, %v430, 0.0
    %435 = vadd.xlane.f32.xlu0 %v434
    %v436 = vpop.xlane.xlu0 %435
    %v437 = vrcp.pop %v433
    %v438 = vrcp.pop %v436
    %v439 = vmul.f32 %v428, %v437
    %v440 = vmul.f32 %v430, %v438
    %v441 = vpack.c.bf16 %v439, %v439
    %v442 = vpack.c.bf16 %v440, %v440
    %v443 = vpack.c.bf16 %v165, %v165
    %v444 = vpack.c.bf16 %v166, %v166
    %v446 = vsel %vm418, %v441, 0
    %vm448 = vcmask 1043456
    %v450 = vsel %vm448, %v443, 0
    %452 = vmatprep.subr.bf16.mxu0 0
    %453 = vmatpush1.bf16.msra.mxu0 %v450
    %454 = vmatprep.subr.bf16.mxu0 0
    %455 = vmatpush1.bf16.msra.mxu0 0
    %456 = vmatprep.subr.bf16.mxu0 0
    %457 = vmatpush1.bf16.msra.mxu0 0
    %458 = vmatprep.subr.bf16.mxu0 0
    %459 = vmatpush1.bf16.msra.mxu0 0
    %460 = vmatprep.subr.bf16.mxu0 0
    %461 = vmatpush1.bf16.msra.mxu0 0
    %462 = vmatprep.subr.bf16.mxu0 0
    %463 = vmatpush1.bf16.msra.mxu0 0
    %464 = vmatprep.subr.bf16.mxu0 0
    %465 = vmatpush1.bf16.msra.mxu0 0
    %466 = vmatprep.subr.bf16.mxu0 0
    %467 = vmatpush1.bf16.msra.mxu0 0
    %468 = vmatprep.subr.bf16.mxu0 0
    %469 = vmatpush1.bf16.msra.mxu0 0
    %470 = vmatprep.subr.bf16.mxu0 0
    %471 = vmatpush1.bf16.msra.mxu0 0
    %472 = vmatprep.subr.bf16.mxu0 0
    %473 = vmatpush1.bf16.msra.mxu0 0
    %474 = vmatprep.subr.bf16.mxu0 0
    %475 = vmatpush1.bf16.msra.mxu0 0
    %476 = vmatprep.subr.bf16.mxu0 0
    %477 = vmatpush1.bf16.msra.mxu0 0
    %478 = vmatprep.subr.bf16.mxu0 0
    %479 = vmatpush1.bf16.msra.mxu0 0
    %480 = vmatprep.subr.bf16.mxu0 0
    %481 = vmatpush1.bf16.msra.mxu0 0
    %482 = vmatprep.subr.bf16.mxu0 0
    %483 = vmatpush1.bf16.msra.mxu0 0
    %484 = vmatprep.mubr.bf16.mxu0 0
    %485 = vmatmul.mubr.bf16.gmra.mrb[0].mxu0 %v446
    %v486 = vpop.f32.mrb[0].mxu0
    %v487 = vadd.f32 0.0, %v486
    %v488 = vpop.f32.mrb[0].mxu0
    %v489 = vpop.f32.mrb[0].mxu0
    %v490 = vpop.f32.mrb[0].mxu0
    %491 = vdwg.mxu0
    %v493 = vsel %vm418, %v442, 0
    %v496 = vsel %vm448, %v444, 0
    %498 = vmatprep.subr.bf16.mxu0 0
    %499 = vmatpush1.bf16.msra.mxu0 %v496
    %500 = vmatprep.subr.bf16.mxu0 0
    %501 = vmatpush1.bf16.msra.mxu0 0
    %502 = vmatprep.subr.bf16.mxu0 0
    %503 = vmatpush1.bf16.msra.mxu0 0
    %504 = vmatprep.subr.bf16.mxu0 0
    %505 = vmatpush1.bf16.msra.mxu0 0
    %506 = vmatprep.subr.bf16.mxu0 0
    %507 = vmatpush1.bf16.msra.mxu0 0
    %508 = vmatprep.subr.bf16.mxu0 0
    %509 = vmatpush1.bf16.msra.mxu0 0
    %510 = vmatprep.subr.bf16.mxu0 0
    %511 = vmatpush1.bf16.msra.mxu0 0
    %512 = vmatprep.subr.bf16.mxu0 0
    %513 = vmatpush1.bf16.msra.mxu0 0
    %514 = vmatprep.subr.bf16.mxu0 0
    %515 = vmatpush1.bf16.msra.mxu0 0
    %516 = vmatprep.subr.bf16.mxu0 0
    %517 = vmatpush1.bf16.msra.mxu0 0
    %518 = vmatprep.subr.bf16.mxu0 0
    %519 = vmatpush1.bf16.msra.mxu0 0
    %520 = vmatprep.subr.bf16.mxu0 0
    %521 = vmatpush1.bf16.msra.mxu0 0
    %522 = vmatprep.subr.bf16.mxu0 0
    %523 = vmatpush1.bf16.msra.mxu0 0
    %524 = vmatprep.subr.bf16.mxu0 0
    %525 = vmatpush1.bf16.msra.mxu0 0
    %526 = vmatprep.subr.bf16.mxu0 0
    %527 = vmatpush1.bf16.msra.mxu0 0
    %528 = vmatprep.subr.bf16.mxu0 0
    %529 = vmatpush1.bf16.msra.mxu0 0
    %530 = vmatprep.mubr.bf16.mxu0 0
    %531 = vmatmul.mubr.bf16.gmra.mrb[0].mxu0 %v493
    %v532 = vpop.f32.mrb[0].mxu0
    %v533 = vadd.f32 0.0, %v532
    %v534 = vpop.f32.mrb[0].mxu0
    %v535 = vpop.f32.mrb[0].mxu0
    %v536 = vpop.f32.mrb[0].mxu0
    %537 = vdwg.mxu0
    %v538 = vld [vmem:[#allocation7] sm:$0x3]
    %v540 = vlaneseq
    %v541 = vshrl.u32 %v540, 7
    %v542 = vsub.s32 0, %v541
    %v543 = vrot.slane %v538, %v542
    %545 = vbcast.lane.b32.xlu0 %v543, 256
    %v546 = vpop.permute.xlu0 %545
    %v547 = vlaneseq
    %v548 = vshrl.u32 %v547, 7
    %v549 = vsub.s32 1, %v548
    %v550 = vrot.slane %v538, %v549
    %552 = vbcast.lane.b32.xlu0 %v550, 256
    %v553 = vpop.permute.xlu0 %552
    %v556 = vadd.f32 %v421, %v546
    %v557 = vadd.f32 %v424, %v553
    %560 = vset.pattern.permute.xlu0 0
    %561 = vperm.xlu0 %560, %v556
    %v562 = vpop.permute.xlu0 %561
    %563 = vset.pattern.permute.xlu0 0
    %564 = vperm.xlu0 %563, %v557
    %v565 = vpop.permute.xlu0 %564
    %v566 = vlaneseq
    %v567 = vand.u32 %v566, 127
    %v568 = vlaneseq
    %v569 = vshrl.u32 %v568, 7
    %v570 = vsub.s32 %v567, %v569
    %v571 = vrot.slane %v562, %v570
    %v572 = vlaneseq
    %v573 = vshrl.u32 %v572, 7
    %v574 = vsub.s32 %v567, %v573
    %v575 = vrot.slane %v565, %v574
    %vm576 = vcmask 1041409
    %v577 = vsel %vm576, %v575, %v571
    %vm579 = vcmask 58368
    %v580 = vsel %vm579, %v577, -inf
    %581 = vmax.xlane.f32.xlu0 %v580
    %v582 = vpop.xlane.xlu0 %581
    %v584 = vlaneseq
    %v585 = vshrl.u32 %v584, 7
    %v586 = vsub.s32 0, %v585
    %v587 = vrot.slane %v582, %v586
    %v588 = vlaneseq
    %v589 = vshrl.u32 %v588, 7
    %v590 = vsub.s32 1, %v589
    %v591 = vrot.slane %v582, %v590
    %v594 = vsub.f32 %v556, %v587
    %v595 = vsub.f32 %v557, %v591
    %v596 = vmul.f32 %v594, 1.442695
    %v597 = vpow.pop %v596
    %v598 = vmul.f32 %v595, 1.442695
    %v599 = vpow.pop %v598
    %602 = vset.pattern.permute.xlu0 0
    %603 = vperm.xlu0 %602, %v597
    %v604 = vpop.permute.xlu0 %603
    %605 = vset.pattern.permute.xlu0 0
    %606 = vperm.xlu0 %605, %v599
    %v607 = vpop.permute.xlu0 %606
    %v608 = vlaneseq
    %v609 = vshrl.u32 %v608, 7
    %v610 = vsub.s32 %v567, %v609
    %v611 = vrot.slane %v604, %v610
    %v612 = vlaneseq
    %v613 = vshrl.u32 %v612, 7
    %v614 = vsub.s32 %v567, %v613
    %v615 = vrot.slane %v607, %v614
    %v616 = vsel %vm576, %v615, %v611
    %v618 = vsel %vm579, %v616, 0.0
    %619 = vadd.xlane.f32.xlu0 %v618
    %v620 = vpop.xlane.xlu0 %619
    %v621 = vrcp.pop %v620
    %v623 = vlaneseq
    %v624 = vshrl.u32 %v623, 7
    %v625 = vsub.s32 0, %v624
    %v626 = vrot.slane %v621, %v625
    %v627 = vlaneseq
    %v628 = vshrl.u32 %v627, 7
    %v629 = vsub.s32 1, %v628
    %v630 = vrot.slane %v621, %v629
    %v633 = vmul.f32 %v597, %v626
    %v634 = vmul.f32 %v599, %v630
    %636 = vset.pattern.permute.xlu0 0
    %637 = vperm.xlu0 %636, %v633
    %v638 = vpop.permute.xlu0 %637
    %641 = vset.pattern.permute.xlu0 0
    %642 = vperm.xlu0 %641, %v634
    %v643 = vpop.permute.xlu0 %642
    %v645 = vmul.f32 %v638, %v163
    %v646 = vmul.f32 %v643, %v164
    %v647 = vsel %vm184, %v645, 0.0
    %v648 = vrot.slane %v647, 4
    %v649 = vadd.f32 %v647, %v648
    %v650 = vrot.slane %v649, 2
    %v651 = vadd.f32 %v649, %v650
    %v652 = vrot.slane %v651, 1
    %v653 = vadd.f32 %v651, %v652
    %v654 = vsel %vm184, %v646, 0.0
    %v655 = vrot.slane %v654, 4
    %v656 = vadd.f32 %v654, %v655
    %v657 = vrot.slane %v656, 2
    %v658 = vadd.f32 %v656, %v657
    %v659 = vrot.slane %v658, 1
    %v660 = vadd.f32 %v658, %v659
    %v661 = vmul.f32 %v163, %v487
    %v662 = vmul.f32 %v164, %v533
    %v663 = vmul.f32 %v163, %v653
    %v664 = vmul.f32 %v164, %v660
    %667 = vrot.lane.b32.xlu0 %v487, 32
    %v668 = vpop.permute.xlu0 %667
    %669 = vrot.lane.b32.xlu0 %v533, 32
    %v670 = vpop.permute.xlu0 %669
    %675 = vrot.lane.b32.xlu0 %v661, 64
    %v676 = vpop.permute.xlu0 %675
    %677 = vrot.lane.b32.xlu0 %v662, 64
    %v678 = vpop.permute.xlu0 %677
    %683 = vrot.lane.b32.xlu0 %v663, 96
    %v684 = vpop.permute.xlu0 %683
    %685 = vrot.lane.b32.xlu0 %v664, 96
    %v686 = vpop.permute.xlu0 %685
    %v689 = vsel %vm184, %v163, %v668
    %v690 = vsel %vm184, %v164, %v670
    %vm691 = vcmask 523264
    %v692 = vsel %vm691, %v689, %v676
    %v693 = vsel %vm691, %v690, %v678
    %vm694 = vcmask 785408
    %v695 = vsel %vm694, %v692, %v684
    %v696 = vsel %vm694, %v693, %v686
    %v697 = vpack.c.bf16 %v696, %v695
    %v698 = vld [vmem:[#allocation13] sm:$0xf]
    %v699 = vld [vmem:[#allocation13 + $0x4] sm:$0xf]
    %v700 = vld [vmem:[#allocation13 + $0x8] sm:$0xf]
    %v701 = vld [vmem:[#allocation13 + $0xc] sm:$0xf]
    %v702 = vld [vmem:[#allocation13 + $0x10] sm:$0xf]
    %v703 = vld [vmem:[#allocation13 + $0x14] sm:$0xf]
    %v704 = vld [vmem:[#allocation13 + $0x18] sm:$0xf]
    %v705 = vld [vmem:[#allocation13 + $0x1c] sm:$0xf]
    %v706 = vld [vmem:[#allocation13 + $0x20] sm:$0xf]
    %v707 = vld [vmem:[#allocation13 + $0x24] sm:$0xf]
    %v708 = vld [vmem:[#allocation13 + $0x28] sm:$0xf]
    %v709 = vld [vmem:[#allocation13 + $0x2c] sm:$0xf]
    %v710 = vld [vmem:[#allocation13 + $0x30] sm:$0xf]
    %v711 = vld [vmem:[#allocation13 + $0x34] sm:$0xf]
    %v712 = vld [vmem:[#allocation13 + $0x38] sm:$0xf]
    %v713 = vld [vmem:[#allocation13 + $0x3c] sm:$0xf]
    %v714 = vld [vmem:[#allocation14] sm:$0x1]
    %v716 = vlaneseq
    %v717 = vshrl.u32 %v716, 7
    %v718 = vsub.s32 0, %v717
    %v719 = vrot.slane %v714, %v718
    %v737 = vunpack.c.l.b16 %v698
    %v738 = vunpack.c.l.b16 %v699
    %v739 = vunpack.c.l.b16 %v700
    %v740 = vunpack.c.l.b16 %v701
    %v741 = vunpack.c.l.b16 %v702
    %v742 = vunpack.c.l.b16 %v703
    %v743 = vunpack.c.l.b16 %v704
    %v744 = vunpack.c.l.b16 %v705
    %v745 = vunpack.c.l.b16 %v706
    %v746 = vunpack.c.l.b16 %v707
    %v747 = vunpack.c.l.b16 %v708
    %v748 = vunpack.c.l.b16 %v709
    %v749 = vunpack.c.l.b16 %v710
    %v750 = vunpack.c.l.b16 %v711
    %v751 = vunpack.c.l.b16 %v712
    %v752 = vunpack.c.l.b16 %v713
    %v753 = vpack.c.b16 %v738, %v737
    %v754 = vpack.c.b16 %v740, %v739
    %v755 = vpack.c.b16 %v742, %v741
    %v756 = vpack.c.b16 %v744, %v743
    %v757 = vpack.c.b16 %v746, %v745
    %v758 = vpack.c.b16 %v748, %v747
    %v759 = vpack.c.b16 %v750, %v749
    %v760 = vpack.c.b16 %v752, %v751
    %769 = vmatprep.subr.bf16.mxu0 0
    %770 = vmatpush1.bf16.msra.mxu0 %v753
    %771 = vmatprep.subr.bf16.mxu0 0
    %772 = vmatpush1.bf16.msra.mxu0 %v754
    %773 = vmatprep.subr.bf16.mxu0 0
    %774 = vmatpush1.bf16.msra.mxu0 %v755
    %775 = vmatprep.subr.bf16.mxu0 0
    %776 = vmatpush1.bf16.msra.mxu0 %v756
    %777 = vmatprep.subr.bf16.mxu0 0
    %778 = vmatpush1.bf16.msra.mxu0 %v757
    %779 = vmatprep.subr.bf16.mxu0 0
    %780 = vmatpush1.bf16.msra.mxu0 %v758
    %781 = vmatprep.subr.bf16.mxu0 0
    %782 = vmatpush1.bf16.msra.mxu0 %v759
    %783 = vmatprep.subr.bf16.mxu0 0
    %784 = vmatpush1.bf16.msra.mxu0 %v760
    %785 = vmatprep.subr.bf16.mxu0 0
    %786 = vmatpush1.bf16.msra.mxu0 0
    %787 = vmatprep.subr.bf16.mxu0 0
    %788 = vmatpush1.bf16.msra.mxu0 0
    %789 = vmatprep.subr.bf16.mxu0 0
    %790 = vmatpush1.bf16.msra.mxu0 0
    %791 = vmatprep.subr.bf16.mxu0 0
    %792 = vmatpush1.bf16.msra.mxu0 0
    %793 = vmatprep.subr.bf16.mxu0 0
    %794 = vmatpush1.bf16.msra.mxu0 0
    %795 = vmatprep.subr.bf16.mxu0 0
    %796 = vmatpush1.bf16.msra.mxu0 0
    %797 = vmatprep.subr.bf16.mxu0 0
    %798 = vmatpush1.bf16.msra.mxu0 0
    %799 = vmatprep.subr.bf16.mxu0 0
    %800 = vmatpush1.bf16.msra.mxu0 0
    %801 = vmatprep.mubr.bf16.mxu0 0
    %802 = vmatmul.mubr.bf16.gmra.mrb[0].mxu0 %v697
    %v803 = vpop.f32.mrb[0].mxu0
    %v804 = vadd.f32 %v719, %v803
    %v805 = vpop.f32.mrb[0].mxu0
    %v806 = vpop.f32.mrb[0].mxu0
    %v807 = vadd.f32 %v719, %v806
    %v808 = vpop.f32.mrb[0].mxu0
    %809 = vdwg.mxu0
    %v810 = vmax.f32 %v804, 0.0
    %v811 = vmax.f32 %v807, 0.0
    %v812 = vpack.c.bf16 %v811, %v810
    %v813 = vld [vmem:[#allocation16] sm:$0xf]
    %v814 = vld [vmem:[#allocation16 + $0x4] sm:$0xf]
    %v815 = vld [vmem:[#allocation16 + $0x8] sm:$0xf]
    %v816 = vld [vmem:[#allocation16 + $0xc] sm:$0xf]
    %v817 = vld [vmem:[#allocation17] sm:$0x1]
    %v819 = vlaneseq
    %v820 = vshrl.u32 %v819, 7
    %v821 = vsub.s32 0, %v820
    %v822 = vrot.slane %v817, %v821
    %v828 = vunpack.c.l.b16 %v813
    %v829 = vunpack.c.l.b16 %v814
    %v830 = vunpack.c.l.b16 %v815
    %v831 = vunpack.c.l.b16 %v816
    %v832 = vpack.c.b16 %v829, %v828
    %v833 = vpack.c.b16 %v831, %v830
    %v837 = vsel %vm184, %v812, 0
    %839 = vmatprep.subr.bf16.mxu0 0
    %840 = vmatpush1.bf16.msra.mxu0 %v832
    %841 = vmatprep.subr.bf16.mxu0 0
    %842 = vmatpush1.bf16.msra.mxu0 %v833
    %843 = vmatprep.subr.bf16.mxu0 0
    %844 = vmatpush1.bf16.msra.mxu0 0
    %845 = vmatprep.subr.bf16.mxu0 0
    %846 = vmatpush1.bf16.msra.mxu0 0
    %847 = vmatprep.subr.bf16.mxu0 0
    %848 = vmatpush1.bf16.msra.mxu0 0
    %849 = vmatprep.subr.bf16.mxu0 0
    %850 = vmatpush1.bf16.msra.mxu0 0
    %851 = vmatprep.subr.bf16.mxu0 0
    %852 = vmatpush1.bf16.msra.mxu0 0
    %853 = vmatprep.subr.bf16.mxu0 0
    %854 = vmatpush1.bf16.msra.mxu0 0
    %855 = vmatprep.subr.bf16.mxu0 0
    %856 = vmatpush1.bf16.msra.mxu0 0
    %857 = vmatprep.subr.bf16.mxu0 0
    %858 = vmatpush1.bf16.msra.mxu0 0
    %859 = vmatprep.subr.bf16.mxu0 0
    %860 = vmatpush1.bf16.msra.mxu0 0
    %861 = vmatprep.subr.bf16.mxu0 0
    %862 = vmatpush1.bf16.msra.mxu0 0
    %863 = vmatprep.subr.bf16.mxu0 0
    %864 = vmatpush1.bf16.msra.mxu0 0
    %865 = vmatprep.subr.bf16.mxu0 0
    %866 = vmatpush1.bf16.msra.mxu0 0
    %867 = vmatprep.subr.bf16.mxu0 0
    %868 = vmatpush1.bf16.msra.mxu0 0
    %869 = vmatprep.subr.bf16.mxu0 0
    %870 = vmatpush1.bf16.msra.mxu0 0
    %871 = vmatprep.mubr.bf16.mxu0 0
    %872 = vmatmul.mubr.bf16.gmra.mrb[0].mxu0 %v837
    %v873 = vpop.f32.mrb[0].mxu0
    %v874 = vadd.f32 %v822, %v873
    %v875 = vpop.f32.mrb[0].mxu0
    %v876 = vpop.f32.mrb[0].mxu0
    %v877 = vadd.f32 %v822, %v876
    %v878 = vpop.f32.mrb[0].mxu0
    %879 = vdwg.mxu0
    %v880 = vpack.c.bf16 %v877, %v874
    %v882 = vunpack.c.l.b16 %v880
    %v883 = vunpack.c.h.b16 %v880
    %v884 = vpack.c.b16 %v882, %v882
    %v885 = vpack.c.b16 %v883, %v883
    %888 = vst [vmem:[#allocation19] sm:$0xf] %v884
    %889 = vst [vmem:[#allocation19 + $0x4] sm:$0xf] %v885
    // Predicated region
    $region82: #{tpu_custom_call.1} parent=1 // pred_check
      _
    $region83: #{tpu_custom_call.1} parent=1 // pred_check_branch
      %891 = sbr.rel (0) target = $region85
    $region84: #{tpu_custom_call.1} parent=1 // pred_region
      %s893 = ssub.s32 128, 128
      %894 = vsyncadd [#allocation4], %s893
      %s895 = sshll.u32 [#allocation19], 4
      %s896 = int_to_ptr.vmem [resolvable:$true] %s895
      %901 = dma.vmem_to_hbm [thread:$0]  %s896, 128, %s10, [#allocation4], 64, 64, 4
    $region85: #{tpu_custom_call.1} parent=1 // pred_fallthru
      _
    // Predicated region
    $region86: #{tpu_custom_call.1} parent=1 // pred_check
      _
    $region87: #{tpu_custom_call.1} parent=1 // pred_check_branch
      %903 = sbr.rel (0) target = $region89
    $region88: #{tpu_custom_call.1} parent=1 // pred_region
      %904 = dma.done [#allocation4], 128
    $region89: #{tpu_custom_call.1} parent=1 // pred_fallthru
      _
    %905 = vsyncpa [#allocation3], 1
    %906 = vsyncpa [#allocation6], 1
    %907 = vsyncpa [#allocation9], 1
    %908 = vsyncpa [#allocation12], 1
    %909 = vsyncpa [#allocation15], 1
    %910 = vsyncpa [#allocation18], 1
    %911 = vsyncpa [#allocation4], 1

</llo_original>
